<compile_context>
chip_gen: v7x
topology: tpu7x:2x2x1
jax: 0.10.0
libtpu: 0.0.40
codegen_flags: <defaults>
</compile_context>

<pallas_src>
import jax
import jax.numpy as jnp
from jax.experimental import pallas as pl
from jax.experimental.pallas import tpu as pltpu

# ----------------------------- config (small) -----------------------------
B = 2               # batch
H = W = 16          # spatial
C_IN = 5            # in_channels (module default)
PATCH = 4           # convnext stem: kernel=4, stride=4, padding=0
HP, WP = H // PATCH, W // PATCH
S = HP * WP         # number of patches (spatial tokens after stem)
C_STEM = 32         # synthetic stand-in for convnext stem width (96)
IN_FEATURES = 64    # synthetic stand-in for convnext head in_features (768)
NUM_CONDITIONS = 5
NUM_CLASSES = 3
LANE = 128          # lane-dense padding for the kernel output / folded weights

VMEM = pltpu.MemorySpace.VMEM
SMEM = pltpu.MemorySpace.SMEM


# ------------------------------ Pallas kernel ------------------------------
def fused_kernel(cond_ref, x_ref, w_sp_ref, b_stem_ref, w_head_ref, b_head_ref,
                 emb_cls_ref, out_ref):
    """stem-conv + global-avg-pool + proj + condition-embedding + classifier."""
    # (1) stem conv fused with global average pool (both linear -> one matmul
    #     against the host-tiled, 1/S-scaled stem weight).  Activations stay
    #     2-D: no patch extraction, no 3-D reshape, no XLU reduction.
    pooled = (jnp.dot(x_ref[...], w_sp_ref[...],
                      preferred_element_type=jnp.float32)
              + b_stem_ref[...])                                    # (B, C_STEM)

    # (2) backbone-projection -> classifier folded on host into one
    #     (C_STEM, LANE)-padded weight: a single small matmul, lane-dense out.
    logits = (jnp.dot(pooled, w_head_ref[...],
                      preferred_element_type=jnp.float32)
              + b_head_ref[...])                                    # (B, LANE)

    # (3) nn.Embedding(condition) folded through the classifier
    #     ((feats+emb)@Wc == feats@Wc + emb@Wc); lookup done as a one-hot
    #     matmul built from SMEM scalar condition indices.
    col = jax.lax.broadcasted_iota(jnp.int32, (B, NUM_CONDITIONS), 1)
    row = jax.lax.broadcasted_iota(jnp.int32, (B, NUM_CONDITIONS), 0)
    onehot = jnp.zeros((B, NUM_CONDITIONS), jnp.float32)
    for i in range(B):                                 # B is tiny and static
        onehot = onehot + jnp.where((row == i) & (col == cond_ref[i]), 1.0, 0.0)
    logits = logits + jnp.dot(onehot, emb_cls_ref[...],
                              preferred_element_type=jnp.float32)   # (B, LANE)

    out_ref[...] = logits


# ------------------------- host-side parameter folding -----------------------
def fold_params(p):
    """One-time folding of the linear chains (exact up to fp reassociation)."""
    # Stem weight (dy, dx, cin, cout) tiled over the full HxW grid and scaled
    # by 1/S so that  x_flat @ w_stempool + b_stem == GAP(stem_conv(x)).
    w4 = p["w_stem"].reshape(PATCH, PATCH, C_IN, C_STEM)
    w_stempool = (jnp.tile(w4, (HP, WP, 1, 1)) / S).reshape(H * W * C_IN, C_STEM)
    # proj -> classifier chain and embedding -> classifier folded; outputs
    # zero-padded to 128 lanes so the kernel's stores are lane-dense.
    w_head = p["w_proj"] @ p["w_cls"]                       # (C_STEM, NUM_CLASSES)
    b_head = p["b_proj"] @ p["w_cls"] + p["b_cls"]          # (1, NUM_CLASSES)
    emb_cls = p["emb_table"] @ p["w_cls"]                   # (NUM_CONDITIONS, NUM_CLASSES)
    pad = ((0, 0), (0, LANE - NUM_CLASSES))
    return {
        "w_stempool": w_stempool,
        "b_stem": p["b_stem"],
        "w_head": jnp.pad(w_head, pad),
        "b_head": jnp.pad(b_head, pad),
        "emb_cls": jnp.pad(emb_cls, pad),
    }


# ------------------------------ JAX glue -------------------------------------
@jax.jit
def conditional_cnn_forward(x, condition, fp):
    # NHWC flatten is contiguous -> free reshape (no transpose, no HBM copy).
    x_flat = x.reshape(B, H * W * C_IN)                     # (B, 1280)
    cond = condition.astype(jnp.int32)                      # (B,) scalars -> SMEM

    out = pl.pallas_call(
        fused_kernel,
        out_shape=jax.ShapeDtypeStruct((B, LANE), jnp.float32),
        in_specs=[
            pl.BlockSpec(memory_space=SMEM),   # condition indices (scalar path)
            pl.BlockSpec(memory_space=VMEM),   # x_flat
            pl.BlockSpec(memory_space=VMEM),   # w_stempool (stem (x) pool fold)
            pl.BlockSpec(memory_space=VMEM),   # b_stem
            pl.BlockSpec(memory_space=VMEM),   # w_head (proj @ cls, lane-padded)
            pl.BlockSpec(memory_space=VMEM),   # b_head
            pl.BlockSpec(memory_space=VMEM),   # emb_cls (emb @ cls, lane-padded)
        ],
        out_specs=pl.BlockSpec(memory_space=VMEM),
        # No grid / tiling / multi-buffering: total footprint ~220 KB, far
        # below VMEM on v5e/v6e/v7x; a grid would only add per-step overhead.
    )(cond, x_flat, fp["w_stempool"], fp["b_stem"], fp["w_head"],
      fp["b_head"], fp["emb_cls"])

    return out[:, :NUM_CLASSES]


# ------------------------- pure-JAX reference (unfolded) ---------------------
def extract_patches(x):
    """(B, H, W, C) -> (B*Hp*Wp, PATCH*PATCH*C), row-major over (ph, pw, c)."""
    b, h, w, c = x.shape
    x = x.reshape(b, h // PATCH, PATCH, w // PATCH, PATCH, c)
    x = x.transpose(0, 1, 3, 2, 4, 5)
    return x.reshape(b * (h // PATCH) * (w // PATCH), PATCH * PATCH * c)


def reference_forward(x, condition, params):
    patches = extract_patches(x)
    stem = patches @ params["w_stem"] + params["b_stem"]
    stem = stem.reshape(B, S, C_STEM)
    pooled = stem.mean(axis=1)
    feats = pooled @ params["w_proj"] + params["b_proj"]
    cond_emb = params["emb_table"][condition]
    combined = feats + cond_emb
    return combined @ params["w_cls"] + params["b_cls"]


# ------------------------------ parameters -----------------------------------
def init_params(key):
    ks = jax.random.split(key, 6)
    pdim = PATCH * PATCH * C_IN
    return {
        # modified stem conv, stored as (kH*kW*C_in, C_out) matmul weight
        "w_stem": jax.random.normal(ks[0], (pdim, C_STEM), jnp.float32) * (1.0 / pdim) ** 0.5,
        "b_stem": jax.random.normal(ks[1], (1, C_STEM), jnp.float32) * 0.02,
        # backbone stand-in projection
        "w_proj": jax.random.normal(ks[2], (C_STEM, IN_FEATURES), jnp.float32) * (1.0 / C_STEM) ** 0.5,
        "b_proj": jnp.zeros((1, IN_FEATURES), jnp.float32),
        # nn.Embedding(num_conditions, in_features)
        "emb_table": jax.random.normal(ks[3], (NUM_CONDITIONS, IN_FEATURES), jnp.float32),
        # nn.Linear(in_features, num_classes)
        "w_cls": jax.random.normal(ks[4], (IN_FEATURES, NUM_CLASSES), jnp.float32) * (1.0 / IN_FEATURES) ** 0.5,
        "b_cls": jax.random.normal(ks[5], (1, NUM_CLASSES), jnp.float32) * 0.02,
    }


# --------------------------------- main ---------------------------------------
if __name__ == "__main__":
    key = jax.random.PRNGKey(0)
    k_param, k_x, k_c = jax.random.split(key, 3)

    params = init_params(k_param)
    folded = fold_params(params)          # one-time host-side weight folding
    x = jax.random.normal(k_x, (B, H, W, C_IN), jnp.float32)          # NHWC
    condition = jax.random.randint(k_c, (B,), 0, NUM_CONDITIONS, jnp.int32)

    out = conditional_cnn_forward(x, condition, folded)
    out = jax.block_until_ready(out)

    ref = reference_forward(x, condition, params)
    assert out.shape == (B, NUM_CLASSES)
    assert jnp.allclose(out, ref, atol=2e-2, rtol=2e-2), "mismatch vs reference"

    print("KERNEL_OK")
</pallas_src>

<mosaic_0001>
module attributes {stable_mosaic.version = 11 : i64} {
  func.func @fused_kernel(%arg0: memref<2xi32, #tpu.memory_space<smem>>, %arg1: memref<2x1280xf32, #tpu.memory_space<vmem>>, %arg2: memref<1280x32xf32, #tpu.memory_space<vmem>>, %arg3: memref<1x32xf32, #tpu.memory_space<vmem>>, %arg4: memref<32x128xf32, #tpu.memory_space<vmem>>, %arg5: memref<1x128xf32, #tpu.memory_space<vmem>>, %arg6: memref<5x128xf32, #tpu.memory_space<vmem>>, %arg7: memref<2x128xf32, #tpu.memory_space<vmem>>) attributes {dimension_semantics = [], scalar_prefetch = 0 : i64, scratch_operands = 0 : i64, tpu.core_type = #tpu.core_type<tc>} {
    %c0 = arith.constant 0 : index
    %c0_0 = arith.constant 0 : index
    %0 = vector.load %arg1[%c0, %c0_0] : memref<2x1280xf32, #tpu.memory_space<vmem>>, vector<2x1280xf32>
    %c0_1 = arith.constant 0 : index
    %c0_2 = arith.constant 0 : index
    %1 = vector.load %arg2[%c0_1, %c0_2] : memref<1280x32xf32, #tpu.memory_space<vmem>>, vector<1280x32xf32>
    %cst = arith.constant dense<0.000000e+00> : vector<2x32xf32>
    %2 = tpu.matmul %0, %1, %cst {dimension_numbers = #tpu.dot_dimension_numbers<[1], [0], [0], [1], [0, 0, 1, 1], [], []>} : vector<2x1280xf32>, vector<1280x32xf32>, vector<2x32xf32> -> vector<2x32xf32>
    %c0_3 = arith.constant 0 : index
    %c0_4 = arith.constant 0 : index
    %3 = vector.load %arg3[%c0_3, %c0_4] : memref<1x32xf32, #tpu.memory_space<vmem>>, vector<1x32xf32>
    %4 = vector.broadcast %3 : vector<1x32xf32> to vector<2x32xf32>
    %5 = arith.addf %2, %4 : vector<2x32xf32>
    %c0_5 = arith.constant 0 : index
    %c0_6 = arith.constant 0 : index
    %6 = vector.load %arg4[%c0_5, %c0_6] : memref<32x128xf32, #tpu.memory_space<vmem>>, vector<32x128xf32>
    %cst_7 = arith.constant dense<0.000000e+00> : vector<2x128xf32>
    %7 = tpu.matmul %5, %6, %cst_7 {dimension_numbers = #tpu.dot_dimension_numbers<[1], [0], [0], [1], [0, 0, 1, 1], [], []>} : vector<2x32xf32>, vector<32x128xf32>, vector<2x128xf32> -> vector<2x128xf32>
    %c0_8 = arith.constant 0 : index
    %c0_9 = arith.constant 0 : index
    %8 = vector.load %arg5[%c0_8, %c0_9] : memref<1x128xf32, #tpu.memory_space<vmem>>, vector<1x128xf32>
    %9 = vector.broadcast %8 : vector<1x128xf32> to vector<2x128xf32>
    %10 = arith.addf %7, %9 : vector<2x128xf32>
    %11 = tpu.iota {dimensions = array<i32: 1>} : vector<2x5xi32>
    %12 = tpu.iota {dimensions = array<i32: 0>} : vector<2x5xi32>
    %cst_10 = arith.constant 0.000000e+00 : f32
    %13 = vector.broadcast %cst_10 : f32 to vector<2x5xf32>
    %c0_i32 = arith.constant 0 : i32
    %14 = vector.broadcast %c0_i32 : i32 to vector<2x5xi32>
    %15 = arith.cmpi eq, %12, %14 : vector<2x5xi32>
    %c0_11 = arith.constant 0 : index
    %16 = memref.load %arg0[%c0_11] : memref<2xi32, #tpu.memory_space<smem>>
    %17 = vector.broadcast %16 : i32 to vector<2x5xi32>
    %18 = arith.cmpi eq, %11, %17 : vector<2x5xi32>
    %19 = arith.andi %15, %18 : vector<2x5xi1>
    %cst_12 = arith.constant 1.000000e+00 : f32
    %cst_13 = arith.constant 0.000000e+00 : f32
    %20 = vector.broadcast %cst_12 : f32 to vector<2x5xf32>
    %21 = vector.broadcast %cst_13 : f32 to vector<2x5xf32>
    %22 = arith.select %19, %20, %21 : vector<2x5xi1>, vector<2x5xf32>
    %23 = arith.addf %13, %22 : vector<2x5xf32>
    %c1_i32 = arith.constant 1 : i32
    %24 = vector.broadcast %c1_i32 : i32 to vector<2x5xi32>
    %25 = arith.cmpi eq, %12, %24 : vector<2x5xi32>
    %c1 = arith.constant 1 : index
    %26 = memref.load %arg0[%c1] : memref<2xi32, #tpu.memory_space<smem>>
    %27 = vector.broadcast %26 : i32 to vector<2x5xi32>
    %28 = arith.cmpi eq, %11, %27 : vector<2x5xi32>
    %29 = arith.andi %25, %28 : vector<2x5xi1>
    %cst_14 = arith.constant 1.000000e+00 : f32
    %cst_15 = arith.constant 0.000000e+00 : f32
    %30 = vector.broadcast %cst_14 : f32 to vector<2x5xf32>
    %31 = vector.broadcast %cst_15 : f32 to vector<2x5xf32>
    %32 = arith.select %29, %30, %31 : vector<2x5xi1>, vector<2x5xf32>
    %33 = arith.addf %23, %32 : vector<2x5xf32>
    %c0_16 = arith.constant 0 : index
    %c0_17 = arith.constant 0 : index
    %34 = vector.load %arg6[%c0_16, %c0_17] : memref<5x128xf32, #tpu.memory_space<vmem>>, vector<5x128xf32>
    %cst_18 = arith.constant dense<0.000000e+00> : vector<2x128xf32>
    %35 = tpu.matmul %33, %34, %cst_18 {dimension_numbers = #tpu.dot_dimension_numbers<[1], [0], [0], [1], [0, 0, 1, 1], [], []>} : vector<2x5xf32>, vector<5x128xf32>, vector<2x128xf32> -> vector<2x128xf32>
    %36 = arith.addf %10, %35 : vector<2x128xf32>
    %c0_19 = arith.constant 0 : index
    %c0_20 = arith.constant 0 : index
    %37 = vector.load %arg7[%c0_19, %c0_20] : memref<2x128xf32, #tpu.memory_space<vmem>>, vector<2x128xf32>
    tpu.vector_store %arg7[%c0_19, %c0_20], %36 {strides = array<i32>} : memref<2x128xf32, #tpu.memory_space<vmem>>, vector<2x128xf32>,
    return
  }
}

</mosaic_0001>

<llo_original>
// kernel: conditional_cnn_forward.1
$region0: #{conditional_cnn_forward.1}
  #allocation0 [shape = 'u32[]', space=smem, size = 0x4, offset = 0x4, fixed_abs, tag = 'smem constant byte address 0x4 - core index']
  #allocation1 [shape = 'u32[144,128]{1,0:T(1,128)}', space=vmem, size = 0x12000, scoped, tag = 'internal scratch']
  %s0 = inlined_call_operand.vmem [shape: s32[2], index: 0, kind: input, shape index: {}]
  %s1 = inlined_call_operand.vmem [shape: f32[2,1280], index: 1, kind: input, shape index: {}]
  %s2 = inlined_call_operand.vmem [shape: f32[1280,32], index: 2, kind: input, shape index: {}]
  %s3 = inlined_call_operand.vmem [shape: f32[1,32], index: 3, kind: input, shape index: {}]
  %s4 = inlined_call_operand.vmem [shape: f32[32,128], index: 4, kind: input, shape index: {}]
  %s5 = inlined_call_operand.vmem [shape: f32[1,128], index: 5, kind: input, shape index: {}]
  %s6 = inlined_call_operand.vmem [shape: f32[5,128], index: 6, kind: input, shape index: {}]
  %s7 = inlined_call_operand.hbm [shape: f32[2,128], index: 7, kind: output, shape index: {}]
  %s8 = sld [smem:[#allocation0]]
  $region42: #{conditional_cnn_forward.1} parent=0
    _
  %s10 = ssub.s32 1, %s8
  %s11 = scalar_select 0, %s10, %s8
  $region1: #{conditional_cnn_forward.1} parent=0
    #allocation2 [shape = 'u8[512]{0}', space=smem, size = 0x200, scoped, tag = 'input window, operand 0, single buffered']
    #allocation3 [shape = 's32[1]{0}', space=sflag, size = 0x4, scoped, tag = 'scoped memory for conditional_cnn_forward.1']
    #allocation4 [shape = 's32[1]{0}', space=sflag, size = 0x4, scoped, tag = 'scoped memory for conditional_cnn_forward.1']
    #allocation5 [shape = 'u8[1024]{0}', space=vmem, size = 0x400, scoped, tag = 'output window, operand 0, single buffered']
    %12 = vsyncpa [#allocation4], 0
    %13 = vsyncpa [#allocation3], 0
    // Predicated region
    $region2: #{conditional_cnn_forward.1} parent=1 // pred_check
      _
    $region3: #{conditional_cnn_forward.1} parent=1 // pred_check_branch
      %15 = sbr.rel (0) target = $region5
    $region4: #{conditional_cnn_forward.1} parent=1 // pred_region
      %s17 = ssub.s32 16, 16
      %18 = vsyncadd [#allocation4], %s17
      %s20 = sshll.u32 %s0, 4
      %s21 = int_to_ptr.vmem [resolvable:$true] %s20
      %23 = dma.vmem_to_smem %s21, 16, [#allocation2], [#allocation4]
    $region5: #{conditional_cnn_forward.1} parent=1 // pred_fallthru
      _
    // Predicated region
    $region6: #{conditional_cnn_forward.1} parent=1 // pred_check
      _
    $region7: #{conditional_cnn_forward.1} parent=1 // pred_check_branch
      %25 = sbr.rel (0) target = $region9
    $region8: #{conditional_cnn_forward.1} parent=1 // pred_region
      _
    $region9: #{conditional_cnn_forward.1} parent=1 // pred_fallthru
      _
    // Predicated region
    $region10: #{conditional_cnn_forward.1} parent=1 // pred_check
      _
    $region11: #{conditional_cnn_forward.1} parent=1 // pred_check_branch
      %27 = sbr.rel (0) target = $region13
    $region12: #{conditional_cnn_forward.1} parent=1 // pred_region
      _
    $region13: #{conditional_cnn_forward.1} parent=1 // pred_fallthru
      _
    // Predicated region
    $region14: #{conditional_cnn_forward.1} parent=1 // pred_check
      _
    $region15: #{conditional_cnn_forward.1} parent=1 // pred_check_branch
      %29 = sbr.rel (0) target = $region17
    $region16: #{conditional_cnn_forward.1} parent=1 // pred_region
      _
    $region17: #{conditional_cnn_forward.1} parent=1 // pred_fallthru
      _
    // Predicated region
    $region18: #{conditional_cnn_forward.1} parent=1 // pred_check
      _
    $region19: #{conditional_cnn_forward.1} parent=1 // pred_check_branch
      %31 = sbr.rel (0) target = $region21
    $region20: #{conditional_cnn_forward.1} parent=1 // pred_region
      _
    $region21: #{conditional_cnn_forward.1} parent=1 // pred_fallthru
      _
    // Predicated region
    $region22: #{conditional_cnn_forward.1} parent=1 // pred_check
      _
    $region23: #{conditional_cnn_forward.1} parent=1 // pred_check_branch
      %33 = sbr.rel (0) target = $region25
    $region24: #{conditional_cnn_forward.1} parent=1 // pred_region
      _
    $region25: #{conditional_cnn_forward.1} parent=1 // pred_fallthru
      _
    // Predicated region
    $region26: #{conditional_cnn_forward.1} parent=1 // pred_check
      _
    $region27: #{conditional_cnn_forward.1} parent=1 // pred_check_branch
      %35 = sbr.rel (0) target = $region29
    $region28: #{conditional_cnn_forward.1} parent=1 // pred_region
      _
    $region29: #{conditional_cnn_forward.1} parent=1 // pred_fallthru
      _
    // Predicated region
    $region30: #{conditional_cnn_forward.1} parent=1 // pred_check
      _
    $region31: #{conditional_cnn_forward.1} parent=1 // pred_check_branch
      %37 = sbr.rel (0) target = $region33
    $region32: #{conditional_cnn_forward.1} parent=1 // pred_region
      %38 = dma.done [#allocation4], 16
    $region33: #{conditional_cnn_forward.1} parent=1 // pred_fallthru
      _
    %39 = sfence
    %v40 = vld [vmem:[%s1] sm:$0xff]
    %v41 = vld [vmem:[%s1 + $0x8] sm:$0xff]
    %v42 = vld [vmem:[%s1 + $0x10] sm:$0xf]
    %v43 = vld [vmem:[%s2] sm:$0xff]
    %v44 = vld [vmem:[%s2 + $0x8] sm:$0xff]
    %v45 = vld [vmem:[%s2 + $0x10] sm:$0xff]
    %v46 = vld [vmem:[%s2 + $0x18] sm:$0xff]
    %v47 = vld [vmem:[%s2 + $0x20] sm:$0xff]
    %v48 = vld [vmem:[%s2 + $0x28] sm:$0xff]
    %v49 = vld [vmem:[%s2 + $0x30] sm:$0xff]
    %v50 = vld [vmem:[%s2 + $0x38] sm:$0xff]
    %v51 = vld [vmem:[%s2 + $0x40] sm:$0xff]
    %v52 = vld [vmem:[%s2 + $0x48] sm:$0xff]
    %v53 = vld [vmem:[%s2 + $0x50] sm:$0xff]
    %v54 = vld [vmem:[%s2 + $0x58] sm:$0xff]
    %v55 = vld [vmem:[%s2 + $0x60] sm:$0xff]
    %v56 = vld [vmem:[%s2 + $0x68] sm:$0xff]
    %v57 = vld [vmem:[%s2 + $0x70] sm:$0xff]
    %v58 = vld [vmem:[%s2 + $0x78] sm:$0xff]
    %v59 = vld [vmem:[%s2 + $0x80] sm:$0xff]
    %v60 = vld [vmem:[%s2 + $0x88] sm:$0xff]
    %v61 = vld [vmem:[%s2 + $0x90] sm:$0xff]
    %v62 = vld [vmem:[%s2 + $0x98] sm:$0xff]
    %v63 = vld [vmem:[%s2 + $0xa0] sm:$0xff]
    %v64 = vld [vmem:[%s2 + $0xa8] sm:$0xff]
    %v65 = vld [vmem:[%s2 + $0xb0] sm:$0xff]
    %v66 = vld [vmem:[%s2 + $0xb8] sm:$0xff]
    %v67 = vld [vmem:[%s2 + $0xc0] sm:$0xff]
    %v68 = vld [vmem:[%s2 + $0xc8] sm:$0xff]
    %v69 = vld [vmem:[%s2 + $0xd0] sm:$0xff]
    %v70 = vld [vmem:[%s2 + $0xd8] sm:$0xff]
    %v71 = vld [vmem:[%s2 + $0xe0] sm:$0xff]
    %v72 = vld [vmem:[%s2 + $0xe8] sm:$0xff]
    %v73 = vld [vmem:[%s2 + $0xf0] sm:$0xff]
    %v74 = vld [vmem:[%s2 + $0xf8] sm:$0xff]
    %v75 = vld [vmem:[%s2 + $0x100] sm:$0xff]
    %v76 = vld [vmem:[%s2 + $0x108] sm:$0xff]
    %v77 = vld [vmem:[%s2 + $0x110] sm:$0xff]
    %v78 = vld [vmem:[%s2 + $0x118] sm:$0xff]
    %v79 = vld [vmem:[%s2 + $0x120] sm:$0xff]
    %v80 = vld [vmem:[%s2 + $0x128] sm:$0xff]
    %v81 = vld [vmem:[%s2 + $0x130] sm:$0xff]
    %v82 = vld [vmem:[%s2 + $0x138] sm:$0xff]
    %v83 = vld [vmem:[%s2 + $0x140] sm:$0xff]
    %v84 = vld [vmem:[%s2 + $0x148] sm:$0xff]
    %v85 = vld [vmem:[%s2 + $0x150] sm:$0xff]
    %v86 = vld [vmem:[%s2 + $0x158] sm:$0xff]
    %v87 = vld [vmem:[%s2 + $0x160] sm:$0xff]
    %v88 = vld [vmem:[%s2 + $0x168] sm:$0xff]
    %v89 = vld [vmem:[%s2 + $0x170] sm:$0xff]
    %v90 = vld [vmem:[%s2 + $0x178] sm:$0xff]
    %v91 = vld [vmem:[%s2 + $0x180] sm:$0xff]
    %v92 = vld [vmem:[%s2 + $0x188] sm:$0xff]
    %v93 = vld [vmem:[%s2 + $0x190] sm:$0xff]
    %v94 = vld [vmem:[%s2 + $0x198] sm:$0xff]
    %v95 = vld [vmem:[%s2 + $0x1a0] sm:$0xff]
    %v96 = vld [vmem:[%s2 + $0x1a8] sm:$0xff]
    %v97 = vld [vmem:[%s2 + $0x1b0] sm:$0xff]
    %v98 = vld [vmem:[%s2 + $0x1b8] sm:$0xff]
    %v99 = vld [vmem:[%s2 + $0x1c0] sm:$0xff]
    %v100 = vld [vmem:[%s2 + $0x1c8] sm:$0xff]
    %v101 = vld [vmem:[%s2 + $0x1d0] sm:$0xff]
    %v102 = vld [vmem:[%s2 + $0x1d8] sm:$0xff]
    %v103 = vld [vmem:[%s2 + $0x1e0] sm:$0xff]
    %v104 = vld [vmem:[%s2 + $0x1e8] sm:$0xff]
    %v105 = vld [vmem:[%s2 + $0x1f0] sm:$0xff]
    %v106 = vld [vmem:[%s2 + $0x1f8] sm:$0xff]
    %v107 = vld [vmem:[%s2 + $0x200] sm:$0xff]
    %v108 = vld [vmem:[%s2 + $0x208] sm:$0xff]
    %v109 = vld [vmem:[%s2 + $0x210] sm:$0xff]
    %v110 = vld [vmem:[%s2 + $0x218] sm:$0xff]
    %v111 = vld [vmem:[%s2 + $0x220] sm:$0xff]
    %v112 = vld [vmem:[%s2 + $0x228] sm:$0xff]
    %v113 = vld [vmem:[%s2 + $0x230] sm:$0xff]
    %v114 = vld [vmem:[%s2 + $0x238] sm:$0xff]
    %v115 = vld [vmem:[%s2 + $0x240] sm:$0xff]
    %v116 = vld [vmem:[%s2 + $0x248] sm:$0xff]
    %v117 = vld [vmem:[%s2 + $0x250] sm:$0xff]
    %v118 = vld [vmem:[%s2 + $0x258] sm:$0xff]
    %v119 = vld [vmem:[%s2 + $0x260] sm:$0xff]
    %v120 = vld [vmem:[%s2 + $0x268] sm:$0xff]
    %v121 = vld [vmem:[%s2 + $0x270] sm:$0xff]
    %v122 = vld [vmem:[%s2 + $0x278] sm:$0xff]
    %v123 = vld [vmem:[%s2 + $0x280] sm:$0xff]
    %v124 = vld [vmem:[%s2 + $0x288] sm:$0xff]
    %v125 = vld [vmem:[%s2 + $0x290] sm:$0xff]
    %v126 = vld [vmem:[%s2 + $0x298] sm:$0xff]
    %v127 = vld [vmem:[%s2 + $0x2a0] sm:$0xff]
    %v128 = vld [vmem:[%s2 + $0x2a8] sm:$0xff]
    %v129 = vld [vmem:[%s2 + $0x2b0] sm:$0xff]
    %v130 = vld [vmem:[%s2 + $0x2b8] sm:$0xff]
    %v131 = vld [vmem:[%s2 + $0x2c0] sm:$0xff]
    %v132 = vld [vmem:[%s2 + $0x2c8] sm:$0xff]
    %v133 = vld [vmem:[%s2 + $0x2d0] sm:$0xff]
    %v134 = vld [vmem:[%s2 + $0x2d8] sm:$0xff]
    %v135 = vld [vmem:[%s2 + $0x2e0] sm:$0xff]
    %v136 = vld [vmem:[%s2 + $0x2e8] sm:$0xff]
    %v137 = vld [vmem:[%s2 + $0x2f0] sm:$0xff]
    %v138 = vld [vmem:[%s2 + $0x2f8] sm:$0xff]
    %v139 = vld [vmem:[%s2 + $0x300] sm:$0xff]
    %v140 = vld [vmem:[%s2 + $0x308] sm:$0xff]
    %v141 = vld [vmem:[%s2 + $0x310] sm:$0xff]
    %v142 = vld [vmem:[%s2 + $0x318] sm:$0xff]
    %v143 = vld [vmem:[%s2 + $0x320] sm:$0xff]
    %v144 = vld [vmem:[%s2 + $0x328] sm:$0xff]
    %v145 = vld [vmem:[%s2 + $0x330] sm:$0xff]
    %v146 = vld [vmem:[%s2 + $0x338] sm:$0xff]
    %v147 = vld [vmem:[%s2 + $0x340] sm:$0xff]
    %v148 = vld [vmem:[%s2 + $0x348] sm:$0xff]
    %v149 = vld [vmem:[%s2 + $0x350] sm:$0xff]
    %v150 = vld [vmem:[%s2 + $0x358] sm:$0xff]
    %v151 = vld [vmem:[%s2 + $0x360] sm:$0xff]
    %v152 = vld [vmem:[%s2 + $0x368] sm:$0xff]
    %v153 = vld [vmem:[%s2 + $0x370] sm:$0xff]
    %v154 = vld [vmem:[%s2 + $0x378] sm:$0xff]
    %v155 = vld [vmem:[%s2 + $0x380] sm:$0xff]
    %v156 = vld [vmem:[%s2 + $0x388] sm:$0xff]
    %v157 = vld [vmem:[%s2 + $0x390] sm:$0xff]
    %v158 = vld [vmem:[%s2 + $0x398] sm:$0xff]
    %v159 = vld [vmem:[%s2 + $0x3a0] sm:$0xff]
    %v160 = vld [vmem:[%s2 + $0x3a8] sm:$0xff]
    %v161 = vld [vmem:[%s2 + $0x3b0] sm:$0xff]
    %v162 = vld [vmem:[%s2 + $0x3b8] sm:$0xff]
    %v163 = vld [vmem:[%s2 + $0x3c0] sm:$0xff]
    %v164 = vld [vmem:[%s2 + $0x3c8] sm:$0xff]
    %v165 = vld [vmem:[%s2 + $0x3d0] sm:$0xff]
    %v166 = vld [vmem:[%s2 + $0x3d8] sm:$0xff]
    %v167 = vld [vmem:[%s2 + $0x3e0] sm:$0xff]
    %v168 = vld [vmem:[%s2 + $0x3e8] sm:$0xff]
    %v169 = vld [vmem:[%s2 + $0x3f0] sm:$0xff]
    %v170 = vld [vmem:[%s2 + $0x3f8] sm:$0xff]
    %v171 = vld [vmem:[%s2 + $0x400] sm:$0xff]
    %v172 = vld [vmem:[%s2 + $0x408] sm:$0xff]
    %v173 = vld [vmem:[%s2 + $0x410] sm:$0xff]
    %v174 = vld [vmem:[%s2 + $0x418] sm:$0xff]
    %v175 = vld [vmem:[%s2 + $0x420] sm:$0xff]
    %v176 = vld [vmem:[%s2 + $0x428] sm:$0xff]
    %v177 = vld [vmem:[%s2 + $0x430] sm:$0xff]
    %v178 = vld [vmem:[%s2 + $0x438] sm:$0xff]
    %v179 = vld [vmem:[%s2 + $0x440] sm:$0xff]
    %v180 = vld [vmem:[%s2 + $0x448] sm:$0xff]
    %v181 = vld [vmem:[%s2 + $0x450] sm:$0xff]
    %v182 = vld [vmem:[%s2 + $0x458] sm:$0xff]
    %v183 = vld [vmem:[%s2 + $0x460] sm:$0xff]
    %v184 = vld [vmem:[%s2 + $0x468] sm:$0xff]
    %v185 = vld [vmem:[%s2 + $0x470] sm:$0xff]
    %v186 = vld [vmem:[%s2 + $0x478] sm:$0xff]
    %v187 = vld [vmem:[%s2 + $0x480] sm:$0xff]
    %v188 = vld [vmem:[%s2 + $0x488] sm:$0xff]
    %v189 = vld [vmem:[%s2 + $0x490] sm:$0xff]
    %v190 = vld [vmem:[%s2 + $0x498] sm:$0xff]
    %v191 = vld [vmem:[%s2 + $0x4a0] sm:$0xff]
    %v192 = vld [vmem:[%s2 + $0x4a8] sm:$0xff]
    %v193 = vld [vmem:[%s2 + $0x4b0] sm:$0xff]
    %v194 = vld [vmem:[%s2 + $0x4b8] sm:$0xff]
    %v195 = vld [vmem:[%s2 + $0x4c0] sm:$0xff]
    %v196 = vld [vmem:[%s2 + $0x4c8] sm:$0xff]
    %v197 = vld [vmem:[%s2 + $0x4d0] sm:$0xff]
    %v198 = vld [vmem:[%s2 + $0x4d8] sm:$0xff]
    %v199 = vld [vmem:[%s2 + $0x4e0] sm:$0xff]
    %v200 = vld [vmem:[%s2 + $0x4e8] sm:$0xff]
    %v201 = vld [vmem:[%s2 + $0x4f0] sm:$0xff]
    %v202 = vld [vmem:[%s2 + $0x4f8] sm:$0xff]
    %v203 = vld [vmem:[%s3] sm:$0x1]
    %v205 = vlaneseq
    %v206 = vshrl.u32 %v205, 7
    %v207 = vsub.s32 0, %v206
    %v208 = vrot.slane %v203, %v207
    %v213 = vcombine.high %v40, %v40
    %v215 = vunpack.c.l.s4 1983009808
    %v216 = vunpack.c.0.s8 %v215
    %v217 = vlaneseq
    %v218 = vshrl.u32 %v217, 7
    %v219 = vsub.s32 %v216, %v218
    %v220 = vrot.slane %v40, %v219
    %v222 = vunpack.c.l.s4 1983009808
    %v223 = vunpack.c.0.s8 %v222
    %v224 = vlaneseq
    %v225 = vshrl.u32 %v224, 7
    %v226 = vsub.s32 %v223, %v225
    %v227 = vrot.slane %v213, %v226
    %v228 = vcombine.high %v220, %v220
    %v229 = vcombine.high %v227, %v227
    %v230 = vcombine.high %v41, %v41
    %v232 = vunpack.c.l.s4 1983009808
    %v233 = vunpack.c.0.s8 %v232
    %v234 = vlaneseq
    %v235 = vshrl.u32 %v234, 7
    %v236 = vsub.s32 %v233, %v235
    %v237 = vrot.slane %v41, %v236
    %v239 = vunpack.c.l.s4 1983009808
    %v240 = vunpack.c.0.s8 %v239
    %v241 = vlaneseq
    %v242 = vshrl.u32 %v241, 7
    %v243 = vsub.s32 %v240, %v242
    %v244 = vrot.slane %v230, %v243
    %v245 = vcombine.high %v237, %v237
    %v246 = vcombine.high %v244, %v244
    %v248 = vunpack.c.l.s4 1983009808
    %v249 = vunpack.c.0.s8 %v248
    %v250 = vlaneseq
    %v251 = vshrl.u32 %v250, 7
    %v252 = vsub.s32 %v249, %v251
    %v253 = vrot.slane %v42, %v252
    %v254 = vcombine.high %v253, %v253
    %265 = vmatprep.subr.mxu0 0.0
    %266 = vmatpush1.msra.mxu0 %v43
    %267 = vmatprep.subr.mxu0 0.0
    %268 = vmatpush1.msra.mxu0 %v44
    %269 = vmatprep.subr.mxu0 0.0
    %270 = vmatpush1.msra.mxu0 %v45
    %271 = vmatprep.subr.mxu0 0.0
    %272 = vmatpush1.msra.mxu0 %v46
    %273 = vmatprep.subr.mxu0 0.0
    %274 = vmatpush1.msra.mxu0 %v47
    %275 = vmatprep.subr.mxu0 0.0
    %276 = vmatpush1.msra.mxu0 %v48
    %277 = vmatprep.subr.mxu0 0.0
    %278 = vmatpush1.msra.mxu0 %v49
    %279 = vmatprep.subr.mxu0 0.0
    %280 = vmatpush1.msra.mxu0 %v50
    %281 = vmatprep.subr.mxu0 0.0
    %282 = vmatpush1.msra.mxu0 %v51
    %283 = vmatprep.subr.mxu0 0.0
    %284 = vmatpush1.msra.mxu0 %v52
    %285 = vmatprep.subr.mxu0 0.0
    %286 = vmatpush1.msra.mxu0 %v53
    %287 = vmatprep.subr.mxu0 0.0
    %288 = vmatpush1.msra.mxu0 %v54
    %289 = vmatprep.subr.mxu0 0.0
    %290 = vmatpush1.msra.mxu0 %v55
    %291 = vmatprep.subr.mxu0 0.0
    %292 = vmatpush1.msra.mxu0 %v56
    %293 = vmatprep.subr.mxu0 0.0
    %294 = vmatpush1.msra.mxu0 %v57
    %295 = vmatprep.subr.mxu0 0.0
    %296 = vmatpush1.msra.mxu0 %v58
    %297 = vmatprep.subr.mxu0 0.0
    %298 = vmatpush1.msra.mxu0 %v59
    %299 = vmatprep.subr.mxu0 0.0
    %300 = vmatpush1.msra.mxu0 %v60
    %301 = vmatprep.subr.mxu0 0.0
    %302 = vmatpush1.msra.mxu0 %v61
    %303 = vmatprep.subr.mxu0 0.0
    %304 = vmatpush1.msra.mxu0 %v62
    %305 = vmatprep.subr.mxu0 0.0
    %306 = vmatpush1.msra.mxu0 %v63
    %307 = vmatprep.subr.mxu0 0.0
    %308 = vmatpush1.msra.mxu0 %v64
    %309 = vmatprep.subr.mxu0 0.0
    %310 = vmatpush1.msra.mxu0 %v65
    %311 = vmatprep.subr.mxu0 0.0
    %312 = vmatpush1.msra.mxu0 %v66
    %313 = vmatprep.subr.mxu0 0.0
    %314 = vmatpush1.msra.mxu0 %v67
    %315 = vmatprep.subr.mxu0 0.0
    %316 = vmatpush1.msra.mxu0 %v68
    %317 = vmatprep.subr.mxu0 0.0
    %318 = vmatpush1.msra.mxu0 %v69
    %319 = vmatprep.subr.mxu0 0.0
    %320 = vmatpush1.msra.mxu0 %v70
    %321 = vmatprep.subr.mxu0 0.0
    %322 = vmatpush1.msra.mxu0 %v71
    %323 = vmatprep.subr.mxu0 0.0
    %324 = vmatpush1.msra.mxu0 %v72
    %325 = vmatprep.subr.mxu0 0.0
    %326 = vmatpush1.msra.mxu0 %v73
    %327 = vmatprep.subr.mxu0 0.0
    %328 = vmatpush1.msra.mxu0 %v74
    %329 = vmatprep.mubr.f32.mxu0 %v228
    %330 = vmatmul.mubr.f32.gmra.mrb[0].mxu0 %v220
    %v331 = vpop.f32.mrb[0].mxu0
    %v332 = vadd.f32 %v208, %v331
    %v333 = vpop.f32.mrb[0].mxu0
    %334 = vdwg.mxu0
    %335 = vmatprep.subr.mxu0 0.0
    %336 = vmatpush1.msra.mxu0 %v75
    %337 = vmatprep.subr.mxu0 0.0
    %338 = vmatpush1.msra.mxu0 %v76
    %339 = vmatprep.subr.mxu0 0.0
    %340 = vmatpush1.msra.mxu0 %v77
    %341 = vmatprep.subr.mxu0 0.0
    %342 = vmatpush1.msra.mxu0 %v78
    %343 = vmatprep.subr.mxu0 0.0
    %344 = vmatpush1.msra.mxu0 %v79
    %345 = vmatprep.subr.mxu0 0.0
    %346 = vmatpush1.msra.mxu0 %v80
    %347 = vmatprep.subr.mxu0 0.0
    %348 = vmatpush1.msra.mxu0 %v81
    %349 = vmatprep.subr.mxu0 0.0
    %350 = vmatpush1.msra.mxu0 %v82
    %351 = vmatprep.subr.mxu0 0.0
    %352 = vmatpush1.msra.mxu0 %v83
    %353 = vmatprep.subr.mxu0 0.0
    %354 = vmatpush1.msra.mxu0 %v84
    %355 = vmatprep.subr.mxu0 0.0
    %356 = vmatpush1.msra.mxu0 %v85
    %357 = vmatprep.subr.mxu0 0.0
    %358 = vmatpush1.msra.mxu0 %v86
    %359 = vmatprep.subr.mxu0 0.0
    %360 = vmatpush1.msra.mxu0 %v87
    %361 = vmatprep.subr.mxu0 0.0
    %362 = vmatpush1.msra.mxu0 %v88
    %363 = vmatprep.subr.mxu0 0.0
    %364 = vmatpush1.msra.mxu0 %v89
    %365 = vmatprep.subr.mxu0 0.0
    %366 = vmatpush1.msra.mxu0 %v90
    %367 = vmatprep.subr.mxu0 0.0
    %368 = vmatpush1.msra.mxu0 %v91
    %369 = vmatprep.subr.mxu0 0.0
    %370 = vmatpush1.msra.mxu0 %v92
    %371 = vmatprep.subr.mxu0 0.0
    %372 = vmatpush1.msra.mxu0 %v93
    %373 = vmatprep.subr.mxu0 0.0
    %374 = vmatpush1.msra.mxu0 %v94
    %375 = vmatprep.subr.mxu0 0.0
    %376 = vmatpush1.msra.mxu0 %v95
    %377 = vmatprep.subr.mxu0 0.0
    %378 = vmatpush1.msra.mxu0 %v96
    %379 = vmatprep.subr.mxu0 0.0
    %380 = vmatpush1.msra.mxu0 %v97
    %381 = vmatprep.subr.mxu0 0.0
    %382 = vmatpush1.msra.mxu0 %v98
    %383 = vmatprep.subr.mxu0 0.0
    %384 = vmatpush1.msra.mxu0 %v99
    %385 = vmatprep.subr.mxu0 0.0
    %386 = vmatpush1.msra.mxu0 %v100
    %387 = vmatprep.subr.mxu0 0.0
    %388 = vmatpush1.msra.mxu0 %v101
    %389 = vmatprep.subr.mxu0 0.0
    %390 = vmatpush1.msra.mxu0 %v102
    %391 = vmatprep.subr.mxu0 0.0
    %392 = vmatpush1.msra.mxu0 %v103
    %393 = vmatprep.subr.mxu0 0.0
    %394 = vmatpush1.msra.mxu0 %v104
    %395 = vmatprep.subr.mxu0 0.0
    %396 = vmatpush1.msra.mxu0 %v105
    %397 = vmatprep.subr.mxu0 0.0
    %398 = vmatpush1.msra.mxu0 %v106
    %399 = vmatprep.mubr.f32.mxu0 %v229
    %400 = vmatmul.mubr.f32.gmra.mrb[0].mxu0 %v227
    %v401 = vpop.f32.mrb[0].mxu0
    %v402 = vadd.f32 %v332, %v401
    %v403 = vpop.f32.mrb[0].mxu0
    %404 = vdwg.mxu0
    %405 = vmatprep.subr.mxu0 0.0
    %406 = vmatpush1.msra.mxu0 %v107
    %407 = vmatprep.subr.mxu0 0.0
    %408 = vmatpush1.msra.mxu0 %v108
    %409 = vmatprep.subr.mxu0 0.0
    %410 = vmatpush1.msra.mxu0 %v109
    %411 = vmatprep.subr.mxu0 0.0
    %412 = vmatpush1.msra.mxu0 %v110
    %413 = vmatprep.subr.mxu0 0.0
    %414 = vmatpush1.msra.mxu0 %v111
    %415 = vmatprep.subr.mxu0 0.0
    %416 = vmatpush1.msra.mxu0 %v112
    %417 = vmatprep.subr.mxu0 0.0
    %418 = vmatpush1.msra.mxu0 %v113
    %419 = vmatprep.subr.mxu0 0.0
    %420 = vmatpush1.msra.mxu0 %v114
    %421 = vmatprep.subr.mxu0 0.0
    %422 = vmatpush1.msra.mxu0 %v115
    %423 = vmatprep.subr.mxu0 0.0
    %424 = vmatpush1.msra.mxu0 %v116
    %425 = vmatprep.subr.mxu0 0.0
    %426 = vmatpush1.msra.mxu0 %v117
    %427 = vmatprep.subr.mxu0 0.0
    %428 = vmatpush1.msra.mxu0 %v118
    %429 = vmatprep.subr.mxu0 0.0
    %430 = vmatpush1.msra.mxu0 %v119
    %431 = vmatprep.subr.mxu0 0.0
    %432 = vmatpush1.msra.mxu0 %v120
    %433 = vmatprep.subr.mxu0 0.0
    %434 = vmatpush1.msra.mxu0 %v121
    %435 = vmatprep.subr.mxu0 0.0
    %436 = vmatpush1.msra.mxu0 %v122
    %437 = vmatprep.subr.mxu0 0.0
    %438 = vmatpush1.msra.mxu0 %v123
    %439 = vmatprep.subr.mxu0 0.0
    %440 = vmatpush1.msra.mxu0 %v124
    %441 = vmatprep.subr.mxu0 0.0
    %442 = vmatpush1.msra.mxu0 %v125
    %443 = vmatprep.subr.mxu0 0.0
    %444 = vmatpush1.msra.mxu0 %v126
    %445 = vmatprep.subr.mxu0 0.0
    %446 = vmatpush1.msra.mxu0 %v127
    %447 = vmatprep.subr.mxu0 0.0
    %448 = vmatpush1.msra.mxu0 %v128
    %449 = vmatprep.subr.mxu0 0.0
    %450 = vmatpush1.msra.mxu0 %v129
    %451 = vmatprep.subr.mxu0 0.0
    %452 = vmatpush1.msra.mxu0 %v130
    %453 = vmatprep.subr.mxu0 0.0
    %454 = vmatpush1.msra.mxu0 %v131
    %455 = vmatprep.subr.mxu0 0.0
    %456 = vmatpush1.msra.mxu0 %v132
    %457 = vmatprep.subr.mxu0 0.0
    %458 = vmatpush1.msra.mxu0 %v133
    %459 = vmatprep.subr.mxu0 0.0
    %460 = vmatpush1.msra.mxu0 %v134
    %461 = vmatprep.subr.mxu0 0.0
    %462 = vmatpush1.msra.mxu0 %v135
    %463 = vmatprep.subr.mxu0 0.0
    %464 = vmatpush1.msra.mxu0 %v136
    %465 = vmatprep.subr.mxu0 0.0
    %466 = vmatpush1.msra.mxu0 %v137
    %467 = vmatprep.subr.mxu0 0.0
    %468 = vmatpush1.msra.mxu0 %v138
    %469 = vmatprep.mubr.f32.mxu0 %v245
    %470 = vmatmul.mubr.f32.gmra.mrb[0].mxu0 %v237
    %v471 = vpop.f32.mrb[0].mxu0
    %v472 = vadd.f32 %v402, %v471
    %v473 = vpop.f32.mrb[0].mxu0
    %474 = vdwg.mxu0
    %475 = vmatprep.subr.mxu0 0.0
    %476 = vmatpush1.msra.mxu0 %v139
    %477 = vmatprep.subr.mxu0 0.0
    %478 = vmatpush1.msra.mxu0 %v140
    %479 = vmatprep.subr.mxu0 0.0
    %480 = vmatpush1.msra.mxu0 %v141
    %481 = vmatprep.subr.mxu0 0.0
    %482 = vmatpush1.msra.mxu0 %v142
    %483 = vmatprep.subr.mxu0 0.0
    %484 = vmatpush1.msra.mxu0 %v143
    %485 = vmatprep.subr.mxu0 0.0
    %486 = vmatpush1.msra.mxu0 %v144
    %487 = vmatprep.subr.mxu0 0.0
    %488 = vmatpush1.msra.mxu0 %v145
    %489 = vmatprep.subr.mxu0 0.0
    %490 = vmatpush1.msra.mxu0 %v146
    %491 = vmatprep.subr.mxu0 0.0
    %492 = vmatpush1.msra.mxu0 %v147
    %493 = vmatprep.subr.mxu0 0.0
    %494 = vmatpush1.msra.mxu0 %v148
    %495 = vmatprep.subr.mxu0 0.0
    %496 = vmatpush1.msra.mxu0 %v149
    %497 = vmatprep.subr.mxu0 0.0
    %498 = vmatpush1.msra.mxu0 %v150
    %499 = vmatprep.subr.mxu0 0.0
    %500 = vmatpush1.msra.mxu0 %v151
    %501 = vmatprep.subr.mxu0 0.0
    %502 = vmatpush1.msra.mxu0 %v152
    %503 = vmatprep.subr.mxu0 0.0
    %504 = vmatpush1.msra.mxu0 %v153
    %505 = vmatprep.subr.mxu0 0.0
    %506 = vmatpush1.msra.mxu0 %v154
    %507 = vmatprep.subr.mxu0 0.0
    %508 = vmatpush1.msra.mxu0 %v155
    %509 = vmatprep.subr.mxu0 0.0
    %510 = vmatpush1.msra.mxu0 %v156
    %511 = vmatprep.subr.mxu0 0.0
    %512 = vmatpush1.msra.mxu0 %v157
    %513 = vmatprep.subr.mxu0 0.0
    %514 = vmatpush1.msra.mxu0 %v158
    %515 = vmatprep.subr.mxu0 0.0
    %516 = vmatpush1.msra.mxu0 %v159
    %517 = vmatprep.subr.mxu0 0.0
    %518 = vmatpush1.msra.mxu0 %v160
    %519 = vmatprep.subr.mxu0 0.0
    %520 = vmatpush1.msra.mxu0 %v161
    %521 = vmatprep.subr.mxu0 0.0
    %522 = vmatpush1.msra.mxu0 %v162
    %523 = vmatprep.subr.mxu0 0.0
    %524 = vmatpush1.msra.mxu0 %v163
    %525 = vmatprep.subr.mxu0 0.0
    %526 = vmatpush1.msra.mxu0 %v164
    %527 = vmatprep.subr.mxu0 0.0
    %528 = vmatpush1.msra.mxu0 %v165
    %529 = vmatprep.subr.mxu0 0.0
    %530 = vmatpush1.msra.mxu0 %v166
    %531 = vmatprep.subr.mxu0 0.0
    %532 = vmatpush1.msra.mxu0 %v167
    %533 = vmatprep.subr.mxu0 0.0
    %534 = vmatpush1.msra.mxu0 %v168
    %535 = vmatprep.subr.mxu0 0.0
    %536 = vmatpush1.msra.mxu0 %v169
    %537 = vmatprep.subr.mxu0 0.0
    %538 = vmatpush1.msra.mxu0 %v170
    %539 = vmatprep.mubr.f32.mxu0 %v246
    %540 = vmatmul.mubr.f32.gmra.mrb[0].mxu0 %v244
    %v541 = vpop.f32.mrb[0].mxu0
    %v542 = vadd.f32 %v472, %v541
    %v543 = vpop.f32.mrb[0].mxu0
    %544 = vdwg.mxu0
    %545 = vmatprep.subr.mxu0 0.0
    %546 = vmatpush1.msra.mxu0 %v171
    %547 = vmatprep.subr.mxu0 0.0
    %548 = vmatpush1.msra.mxu0 %v172
    %549 = vmatprep.subr.mxu0 0.0
    %550 = vmatpush1.msra.mxu0 %v173
    %551 = vmatprep.subr.mxu0 0.0
    %552 = vmatpush1.msra.mxu0 %v174
    %553 = vmatprep.subr.mxu0 0.0
    %554 = vmatpush1.msra.mxu0 %v175
    %555 = vmatprep.subr.mxu0 0.0
    %556 = vmatpush1.msra.mxu0 %v176
    %557 = vmatprep.subr.mxu0 0.0
    %558 = vmatpush1.msra.mxu0 %v177
    %559 = vmatprep.subr.mxu0 0.0
    %560 = vmatpush1.msra.mxu0 %v178
    %561 = vmatprep.subr.mxu0 0.0
    %562 = vmatpush1.msra.mxu0 %v179
    %563 = vmatprep.subr.mxu0 0.0
    %564 = vmatpush1.msra.mxu0 %v180
    %565 = vmatprep.subr.mxu0 0.0
    %566 = vmatpush1.msra.mxu0 %v181
    %567 = vmatprep.subr.mxu0 0.0
    %568 = vmatpush1.msra.mxu0 %v182
    %569 = vmatprep.subr.mxu0 0.0
    %570 = vmatpush1.msra.mxu0 %v183
    %571 = vmatprep.subr.mxu0 0.0
    %572 = vmatpush1.msra.mxu0 %v184
    %573 = vmatprep.subr.mxu0 0.0
    %574 = vmatpush1.msra.mxu0 %v185
    %575 = vmatprep.subr.mxu0 0.0
    %576 = vmatpush1.msra.mxu0 %v186
    %577 = vmatprep.subr.mxu0 0.0
    %578 = vmatpush1.msra.mxu0 %v187
    %579 = vmatprep.subr.mxu0 0.0
    %580 = vmatpush1.msra.mxu0 %v188
    %581 = vmatprep.subr.mxu0 0.0
    %582 = vmatpush1.msra.mxu0 %v189
    %583 = vmatprep.subr.mxu0 0.0
    %584 = vmatpush1.msra.mxu0 %v190
    %585 = vmatprep.subr.mxu0 0.0
    %586 = vmatpush1.msra.mxu0 %v191
    %587 = vmatprep.subr.mxu0 0.0
    %588 = vmatpush1.msra.mxu0 %v192
    %589 = vmatprep.subr.mxu0 0.0
    %590 = vmatpush1.msra.mxu0 %v193
    %591 = vmatprep.subr.mxu0 0.0
    %592 = vmatpush1.msra.mxu0 %v194
    %593 = vmatprep.subr.mxu0 0.0
    %594 = vmatpush1.msra.mxu0 %v195
    %595 = vmatprep.subr.mxu0 0.0
    %596 = vmatpush1.msra.mxu0 %v196
    %597 = vmatprep.subr.mxu0 0.0
    %598 = vmatpush1.msra.mxu0 %v197
    %599 = vmatprep.subr.mxu0 0.0
    %600 = vmatpush1.msra.mxu0 %v198
    %601 = vmatprep.subr.mxu0 0.0
    %602 = vmatpush1.msra.mxu0 %v199
    %603 = vmatprep.subr.mxu0 0.0
    %604 = vmatpush1.msra.mxu0 %v200
    %605 = vmatprep.subr.mxu0 0.0
    %606 = vmatpush1.msra.mxu0 %v201
    %607 = vmatprep.subr.mxu0 0.0
    %608 = vmatpush1.msra.mxu0 %v202
    %609 = vmatprep.mubr.f32.mxu0 %v254
    %610 = vmatmul.mubr.f32.gmra.mrb[0].mxu0 %v253
    %v611 = vpop.f32.mrb[0].mxu0
    %v612 = vadd.f32 %v542, %v611
    %v613 = vpop.f32.mrb[0].mxu0
    %614 = vdwg.mxu0
    %v615 = vld [vmem:[%s4] sm:$0xff]
    %v616 = vld [vmem:[%s4 + $0x8] sm:$0xff]
    %v617 = vld [vmem:[%s4 + $0x10] sm:$0xff]
    %v618 = vld [vmem:[%s4 + $0x18] sm:$0xff]
    %v619 = vld [vmem:[%s5] sm:$0x1]
    %v621 = vlaneseq
    %v622 = vshrl.u32 %v621, 7
    %v623 = vsub.s32 0, %v622
    %v624 = vrot.slane %v619, %v623
    %vm626 = vcmask 261120
    %v628 = vsel %vm626, %v612, 0
    %630 = vmatprep.subr.mxu0 0.0
    %631 = vmatpush1.msra.mxu0 %v615
    %632 = vmatprep.subr.mxu0 0.0
    %633 = vmatpush1.msra.mxu0 %v616
    %634 = vmatprep.subr.mxu0 0.0
    %635 = vmatpush1.msra.mxu0 %v617
    %636 = vmatprep.subr.mxu0 0.0
    %637 = vmatpush1.msra.mxu0 %v618
    %638 = vmatprep.subr.mxu0 0.0
    %639 = vmatpush1.msra.mxu0 0.0
    %640 = vmatprep.subr.mxu0 0.0
    %641 = vmatpush1.msra.mxu0 0.0
    %642 = vmatprep.subr.mxu0 0.0
    %643 = vmatpush1.msra.mxu0 0.0
    %644 = vmatprep.subr.mxu0 0.0
    %645 = vmatpush1.msra.mxu0 0.0
    %646 = vmatprep.subr.mxu0 0.0
    %647 = vmatpush1.msra.mxu0 0.0
    %648 = vmatprep.subr.mxu0 0.0
    %649 = vmatpush1.msra.mxu0 0.0
    %650 = vmatprep.subr.mxu0 0.0
    %651 = vmatpush1.msra.mxu0 0.0
    %652 = vmatprep.subr.mxu0 0.0
    %653 = vmatpush1.msra.mxu0 0.0
    %654 = vmatprep.subr.mxu0 0.0
    %655 = vmatpush1.msra.mxu0 0.0
    %656 = vmatprep.subr.mxu0 0.0
    %657 = vmatpush1.msra.mxu0 0.0
    %658 = vmatprep.subr.mxu0 0.0
    %659 = vmatpush1.msra.mxu0 0.0
    %660 = vmatprep.subr.mxu0 0.0
    %661 = vmatpush1.msra.mxu0 0.0
    %662 = vmatprep.subr.mxu0 0.0
    %663 = vmatpush1.msra.mxu0 0.0
    %664 = vmatprep.subr.mxu0 0.0
    %665 = vmatpush1.msra.mxu0 0.0
    %666 = vmatprep.subr.mxu0 0.0
    %667 = vmatpush1.msra.mxu0 0.0
    %668 = vmatprep.subr.mxu0 0.0
    %669 = vmatpush1.msra.mxu0 0.0
    %670 = vmatprep.subr.mxu0 0.0
    %671 = vmatpush1.msra.mxu0 0.0
    %672 = vmatprep.subr.mxu0 0.0
    %673 = vmatpush1.msra.mxu0 0.0
    %674 = vmatprep.subr.mxu0 0.0
    %675 = vmatpush1.msra.mxu0 0.0
    %676 = vmatprep.subr.mxu0 0.0
    %677 = vmatpush1.msra.mxu0 0.0
    %678 = vmatprep.subr.mxu0 0.0
    %679 = vmatpush1.msra.mxu0 0.0
    %680 = vmatprep.subr.mxu0 0.0
    %681 = vmatpush1.msra.mxu0 0.0
    %682 = vmatprep.subr.mxu0 0.0
    %683 = vmatpush1.msra.mxu0 0.0
    %684 = vmatprep.subr.mxu0 0.0
    %685 = vmatpush1.msra.mxu0 0.0
    %686 = vmatprep.subr.mxu0 0.0
    %687 = vmatpush1.msra.mxu0 0.0
    %688 = vmatprep.subr.mxu0 0.0
    %689 = vmatpush1.msra.mxu0 0.0
    %690 = vmatprep.subr.mxu0 0.0
    %691 = vmatpush1.msra.mxu0 0.0
    %692 = vmatprep.subr.mxu0 0.0
    %693 = vmatpush1.msra.mxu0 0.0
    %694 = vmatprep.mubr.f32.mxu0 0.0
    %695 = vmatmul.mubr.f32.gmra.mrb[0].mxu0 %v628
    %v696 = vpop.f32.mrb[0].mxu0
    %v697 = vadd.f32 %v624, %v696
    %v698 = vpop.f32.mrb[0].mxu0
    %699 = vdwg.mxu0
    %v700 = vlaneseq
    %v701 = vand.u32 %v700, 127
    %v702 = vlaneseq
    %v703 = vshrl.u32 %v702, 7
    %vm704 = vcmp.eq.s32.totalorder %v703, 0
    %s705 = sld [smem:[#allocation2]]
    %v706 = vstv %s705
    %vm707 = vcmp.eq.s32.totalorder %v701, %v706
    %vm708 = vmand %vm704, %vm707
    %v709 = vsel %vm708, 1.0, 0.0
    %v710 = vadd.f32 %v709, 0.0
    %vm711 = vcmp.eq.s32.totalorder %v703, 1
    %s712 = sld [smem:[#allocation2 + $0x1]]
    %v713 = vstv %s712
    %vm714 = vcmp.eq.s32.totalorder %v701, %v713
    %vm715 = vmand %vm711, %vm714
    %v716 = vsel %vm715, 1.0, 0.0
    %v717 = vadd.f32 %v710, %v716
    %v718 = vld [vmem:[%s6] sm:$0x1f]
    %vm719 = vcmask 39936
    %v721 = vsel %vm719, %v717, 0
    %vm723 = vcmask 1044480
    %v725 = vsel %vm723, %v718, 0
    %727 = vmatprep.subr.mxu0 0.0
    %728 = vmatpush1.msra.mxu0 %v725
    %729 = vmatprep.subr.mxu0 0.0
    %730 = vmatpush1.msra.mxu0 0.0
    %731 = vmatprep.subr.mxu0 0.0
    %732 = vmatpush1.msra.mxu0 0.0
    %733 = vmatprep.subr.mxu0 0.0
    %734 = vmatpush1.msra.mxu0 0.0
    %735 = vmatprep.subr.mxu0 0.0
    %736 = vmatpush1.msra.mxu0 0.0
    %737 = vmatprep.subr.mxu0 0.0
    %738 = vmatpush1.msra.mxu0 0.0
    %739 = vmatprep.subr.mxu0 0.0
    %740 = vmatpush1.msra.mxu0 0.0
    %741 = vmatprep.subr.mxu0 0.0
    %742 = vmatpush1.msra.mxu0 0.0
    %743 = vmatprep.subr.mxu0 0.0
    %744 = vmatpush1.msra.mxu0 0.0
    %745 = vmatprep.subr.mxu0 0.0
    %746 = vmatpush1.msra.mxu0 0.0
    %747 = vmatprep.subr.mxu0 0.0
    %748 = vmatpush1.msra.mxu0 0.0
    %749 = vmatprep.subr.mxu0 0.0
    %750 = vmatpush1.msra.mxu0 0.0
    %751 = vmatprep.subr.mxu0 0.0
    %752 = vmatpush1.msra.mxu0 0.0
    %753 = vmatprep.subr.mxu0 0.0
    %754 = vmatpush1.msra.mxu0 0.0
    %755 = vmatprep.subr.mxu0 0.0
    %756 = vmatpush1.msra.mxu0 0.0
    %757 = vmatprep.subr.mxu0 0.0
    %758 = vmatpush1.msra.mxu0 0.0
    %759 = vmatprep.subr.mxu0 0.0
    %760 = vmatpush1.msra.mxu0 0.0
    %761 = vmatprep.subr.mxu0 0.0
    %762 = vmatpush1.msra.mxu0 0.0
    %763 = vmatprep.subr.mxu0 0.0
    %764 = vmatpush1.msra.mxu0 0.0
    %765 = vmatprep.subr.mxu0 0.0
    %766 = vmatpush1.msra.mxu0 0.0
    %767 = vmatprep.subr.mxu0 0.0
    %768 = vmatpush1.msra.mxu0 0.0
    %769 = vmatprep.subr.mxu0 0.0
    %770 = vmatpush1.msra.mxu0 0.0
    %771 = vmatprep.subr.mxu0 0.0
    %772 = vmatpush1.msra.mxu0 0.0
    %773 = vmatprep.subr.mxu0 0.0
    %774 = vmatpush1.msra.mxu0 0.0
    %775 = vmatprep.subr.mxu0 0.0
    %776 = vmatpush1.msra.mxu0 0.0
    %777 = vmatprep.subr.mxu0 0.0
    %778 = vmatpush1.msra.mxu0 0.0
    %779 = vmatprep.subr.mxu0 0.0
    %780 = vmatpush1.msra.mxu0 0.0
    %781 = vmatprep.subr.mxu0 0.0
    %782 = vmatpush1.msra.mxu0 0.0
    %783 = vmatprep.subr.mxu0 0.0
    %784 = vmatpush1.msra.mxu0 0.0
    %785 = vmatprep.subr.mxu0 0.0
    %786 = vmatpush1.msra.mxu0 0.0
    %787 = vmatprep.subr.mxu0 0.0
    %788 = vmatpush1.msra.mxu0 0.0
    %789 = vmatprep.subr.mxu0 0.0
    %790 = vmatpush1.msra.mxu0 0.0
    %791 = vmatprep.mubr.f32.mxu0 0.0
    %792 = vmatmul.mubr.f32.gmra.mrb[0].mxu0 %v721
    %v793 = vpop.f32.mrb[0].mxu0
    %v794 = vadd.f32 0.0, %v793
    %v795 = vpop.f32.mrb[0].mxu0
    %796 = vdwg.mxu0
    %v797 = vadd.f32 %v697, %v794
    %798 = vst [vmem:[#allocation5] sm:$0x3] %v797
    // Predicated region
    $region34: #{conditional_cnn_forward.1} parent=1 // pred_check
      _
    $region35: #{conditional_cnn_forward.1} parent=1 // pred_check_branch
      %800 = sbr.rel (0) target = $region37
    $region36: #{conditional_cnn_forward.1} parent=1 // pred_region
      %s802 = ssub.s32 32, 32
      %803 = vsyncadd [#allocation3], %s802
      %s805 = sshll.u32 [#allocation5], 4
      %s806 = int_to_ptr.vmem [resolvable:$true] %s805
      %808 = dma.vmem_to_hbm [thread:$0]  %s806, 32, %s7, [#allocation3]
    $region37: #{conditional_cnn_forward.1} parent=1 // pred_fallthru
      _
    // Predicated region
    $region38: #{conditional_cnn_forward.1} parent=1 // pred_check
      _
    $region39: #{conditional_cnn_forward.1} parent=1 // pred_check_branch
      %810 = sbr.rel (0) target = $region41
    $region40: #{conditional_cnn_forward.1} parent=1 // pred_region
      %811 = dma.done [#allocation3], 32
    $region41: #{conditional_cnn_forward.1} parent=1 // pred_fallthru
      _
    %812 = vsyncpa [#allocation3], 1
    %813 = vsyncpa [#allocation4], 1

</llo_original>
